<compile_context>
chip_gen: v5e
topology: v5e:2x2
jax: 0.10.0
libtpu: 0.0.40
codegen_flags: <defaults>
</compile_context>

<pallas_src>
import jax
import jax.numpy as jnp
from jax import lax
from jax.experimental import pallas as pl
from jax.experimental.pallas import tpu as pltpu


def _round_up8(n):
    return ((n + 7) // 8) * 8


def lstm_kernel(x_ref, wg_ref, out_ref):
    # x_ref  : (T, input_size)                           fp32
    # wg_ref : (H + pad(in) + 8 + 8, 4H) fused operand   fp32
    #   rows [0, H)                : W_hh^T              (g-cols pre-scaled x2)
    #   rows [H, H+pad(in))        : W_ih^T zero-padded  (g-cols pre-scaled x2)
    #   row  H+pad(in)             : b_ih + b_hh         (g-cols pre-scaled x2)
    #   row  H+pad(in)+8           : lanes [0,H)=W_out, lane H = b_out
    # out_ref: (1, 1)
    T, input_size = x_ref.shape
    four_h = wg_ref.shape[1]
    H = four_h // 4
    in_pad = _round_up8(input_size)
    r_wih = H
    r_b = H + in_pad
    r_head = r_b + 8

    whh = wg_ref[0:H, :]                                  # (H, 4H), 8-aligned
    b = wg_ref[r_b:r_b + 1, :]                            # (1, 4H), 8-aligned

    # Hoist the input projection + fused bias for all timesteps off the serial
    # dependence chain. input_size == 1 -> pure VPU broadcast multiply (no
    # rank-1 MXU outer product, no lane-sparse operand).
    if input_size == 1:
        wih = wg_ref[r_wih:r_wih + 1, :]                  # (1, 4H), 8-aligned
        xg_all = x_ref[...] * wih + b                     # (T, 4H)
    else:
        wih = wg_ref[r_wih:r_wih + input_size, :]
        xg_all = (
            jnp.dot(x_ref[...], wih, preferred_element_type=jnp.float32) + b
        )

    h = jnp.zeros((1, H), jnp.float32)                    # zero-init hidden_cell
    c = jnp.zeros((1, H), jnp.float32)

    # T is tiny and static: fully unrolled straight-line recurrence.
    # Per step: one tiny MXU matmul, ONE full-vreg sigmoid (EUP), one small
    # tanh(c) (EUP), a handful of VPU ops. tanh(g) recovered from sigmoid via
    # the exact identity tanh(x) = 2*sigmoid(2x) - 1 (g columns pre-scaled x2).
    for t in range(T):
        gates = xg_all[t:t + 1, :] + jnp.dot(
            h, whh, preferred_element_type=jnp.float32
        )                                                 # (1, 4H)
        s = jax.nn.sigmoid(gates)                         # single EUP pass
        i_g = s[:, 0 * H:1 * H]
        f_g = s[:, 1 * H:2 * H]
        g_t = 2.0 * s[:, 2 * H:3 * H] - 1.0               # == tanh(g), VPU FMA
        o_g = s[:, 3 * H:4 * H]
        c = f_g * c + i_g * g_t
        h = o_g * jnp.tanh(c)

    # Output head folded into the fused operand: VPU multiply + lane reduce
    # (no lane-sparse (H,1) matmul, no extra DMA'd operand).
    head = wg_ref[r_head:r_head + 1, :]                   # (1, 4H), 8-aligned
    wout = head[:, 0:H]                                   # (1, H)
    bout = head[:, H:H + 1]                               # (1, 1)
    out_ref[...] = jnp.sum(h * wout, axis=-1, keepdims=True) + bout
    # TODO(synk): the PyTorch module also mutates self.hidden_cell (stateful
    # carry across calls); here only the last-step prediction is returned.


def prepare_params(params):
    """One-time parameter prep (transpose, fuse, align, pre-scale), NOT per call.

    Returns a single fused fp32 operand of shape (H + pad(in) + 16, 4H).
    """
    w_ih, w_hh, b_ih, b_hh, w_out, b_out = params
    four_h, input_size = w_ih.shape
    H = four_h // 4
    # TODO(synk): head folding assumes output_size == 1 (the module default);
    # for output_size > 1 keep a separate (H, output_size) matmul operand.
    assert w_out.shape[0] == 1 and b_out.shape[0] == 1

    # Pre-scale the g-gate block (columns 2H:3H after transpose) by 2 so the
    # kernel can recover tanh(g) from sigmoid(2g) with a VPU FMA (exact).
    scale = jnp.concatenate(
        [jnp.ones((2 * H,), jnp.float32),
         jnp.full((H,), 2.0, jnp.float32),
         jnp.ones((H,), jnp.float32)]
    )[None, :]                                            # (1, 4H)

    whh_t = jnp.transpose(w_hh).astype(jnp.float32) * scale          # (H, 4H)
    wih_t = jnp.transpose(w_ih).astype(jnp.float32) * scale          # (in, 4H)
    b = ((b_ih + b_hh).astype(jnp.float32))[None, :] * scale         # (1, 4H)

    in_pad = _round_up8(input_size)
    wih_block = jnp.zeros((in_pad, four_h), jnp.float32).at[:input_size].set(wih_t)
    b_block = jnp.zeros((8, four_h), jnp.float32).at[0:1].set(b)
    head_block = jnp.zeros((8, four_h), jnp.float32)
    head_block = head_block.at[0, 0:H].set(w_out[0].astype(jnp.float32))
    head_block = head_block.at[0, H].set(b_out[0].astype(jnp.float32))

    w_gates = jnp.concatenate([whh_t, wih_block, b_block, head_block], axis=0)
    return w_gates                                        # (H+pad(in)+16, 4H)


def lstm_forward(input_seq, w_gates):
    """input_seq: (T, input_size) fp32. Returns (1,) fp32 (== predictions[-1])."""
    vmem = pl.BlockSpec(memory_space=pltpu.MemorySpace.VMEM)
    out = pl.pallas_call(
        lstm_kernel,
        out_shape=jax.ShapeDtypeStruct((1, 1), jnp.float32),
        in_specs=[vmem, vmem],
        out_specs=vmem,
    )(input_seq.astype(jnp.float32), w_gates)
    return out[0]


def lstm_reference(input_seq, params):
    """Pure-JAX reference with identical semantics (for verification)."""
    w_ih, w_hh, b_ih, b_hh, w_out, b_out = params
    H = w_hh.shape[1]
    h = jnp.zeros((H,), jnp.float32)
    c = jnp.zeros((H,), jnp.float32)

    def step(carry, x_t):
        h, c = carry
        gates = x_t @ w_ih.T + h @ w_hh.T + b_ih + b_hh
        i_g = jax.nn.sigmoid(gates[0 * H:1 * H])
        f_g = jax.nn.sigmoid(gates[1 * H:2 * H])
        g_g = jnp.tanh(gates[2 * H:3 * H])
        o_g = jax.nn.sigmoid(gates[3 * H:4 * H])
        c_new = f_g * c + i_g * g_g
        h_new = o_g * jnp.tanh(c_new)
        return (h_new, c_new), None

    (h_last, _), _ = lax.scan(step, (h, c), input_seq.astype(jnp.float32))
    return h_last @ w_out.T + b_out


def init_params(key, input_size, hidden_size, output_size):
    """Deterministic PyTorch-style init: U(-1/sqrt(H), 1/sqrt(H))."""
    k = 1.0 / jnp.sqrt(jnp.float32(hidden_size))
    keys = jax.random.split(key, 6)
    w_ih = jax.random.uniform(keys[0], (4 * hidden_size, input_size), jnp.float32, -k, k)
    w_hh = jax.random.uniform(keys[1], (4 * hidden_size, hidden_size), jnp.float32, -k, k)
    b_ih = jax.random.uniform(keys[2], (4 * hidden_size,), jnp.float32, -k, k)
    b_hh = jax.random.uniform(keys[3], (4 * hidden_size,), jnp.float32, -k, k)
    w_out = jax.random.uniform(keys[4], (output_size, hidden_size), jnp.float32, -k, k)
    b_out = jax.random.uniform(keys[5], (output_size,), jnp.float32, -k, k)
    return (w_ih, w_hh, b_ih, b_hh, w_out, b_out)


if __name__ == "__main__":
    SEQ_LEN = 8
    INPUT_SIZE = 1
    # NOTE: module default is hidden=100; H=32 keeps 4H=128 lane-exact.
    # TODO(synk): if H=100 is required, pad H->128 and mask extra lanes.
    HIDDEN = 32
    OUTPUT_SIZE = 1

    key = jax.random.PRNGKey(0)
    k_x, k_p = jax.random.split(key)
    input_seq = jax.random.normal(k_x, (SEQ_LEN, INPUT_SIZE), jnp.float32)
    params = init_params(k_p, INPUT_SIZE, HIDDEN, OUTPUT_SIZE)

    w_gates = prepare_params(params)                       # one-time prep
    forward = jax.jit(lstm_forward)

    pred = jax.block_until_ready(forward(input_seq, w_gates))
    ref = jax.block_until_ready(lstm_reference(input_seq, params))

    assert pred.shape == (OUTPUT_SIZE,)
    assert jnp.allclose(pred, ref, atol=1e-5, rtol=1e-5), (pred, ref)
    print("KERNEL_OK")
</pallas_src>

<mosaic_0001>
module attributes {stable_mosaic.version = 11 : i64} {
  func.func @lstm_kernel(%arg0: memref<8x1xf32, #tpu.memory_space<vmem>>, %arg1: memref<56x128xf32, #tpu.memory_space<vmem>>, %arg2: memref<1x1xf32, #tpu.memory_space<vmem>>) attributes {dimension_semantics = [], scalar_prefetch = 0 : i64, scratch_operands = 0 : i64, tpu.core_type = #tpu.core_type<tc>} {
    %c0 = arith.constant 0 : index
    %c0_0 = arith.constant 0 : index
    %0 = vector.load %arg1[%c0, %c0_0] : memref<56x128xf32, #tpu.memory_space<vmem>>, vector<32x128xf32>
    %c40 = arith.constant 40 : index
    %c0_1 = arith.constant 0 : index
    %1 = vector.load %arg1[%c40, %c0_1] : memref<56x128xf32, #tpu.memory_space<vmem>>, vector<1x128xf32>
    %c32 = arith.constant 32 : index
    %c0_2 = arith.constant 0 : index
    %2 = vector.load %arg1[%c32, %c0_2] : memref<56x128xf32, #tpu.memory_space<vmem>>, vector<1x128xf32>
    %c0_3 = arith.constant 0 : index
    %c0_4 = arith.constant 0 : index
    %3 = vector.load %arg0[%c0_3, %c0_4] : memref<8x1xf32, #tpu.memory_space<vmem>>, vector<8x1xf32>
    %4 = vector.broadcast %3 : vector<8x1xf32> to vector<8x128xf32>
    %5 = vector.broadcast %2 : vector<1x128xf32> to vector<8x128xf32>
    %6 = arith.mulf %4, %5 : vector<8x128xf32>
    %7 = vector.broadcast %1 : vector<1x128xf32> to vector<8x128xf32>
    %8 = arith.addf %6, %7 : vector<8x128xf32>
    %cst = arith.constant 0.000000e+00 : f32
    %9 = vector.broadcast %cst : f32 to vector<1x32xf32>
    %cst_5 = arith.constant 0.000000e+00 : f32
    %10 = vector.broadcast %cst_5 : f32 to vector<1x32xf32>
    %11 = vector.extract_strided_slice %8 {offsets = [0, 0], sizes = [1, 128], strides = [1, 1]} : vector<8x128xf32> to vector<1x128xf32>
    %cst_6 = arith.constant dense<0.000000e+00> : vector<1x128xf32>
    %12 = tpu.matmul %9, %0, %cst_6 {dimension_numbers = #tpu.dot_dimension_numbers<[1], [0], [0], [1], [0, 0, 1, 1], [], []>} : vector<1x32xf32>, vector<32x128xf32>, vector<1x128xf32> -> vector<1x128xf32>
    %13 = arith.addf %11, %12 : vector<1x128xf32>
    %14 = arith.negf %13 : vector<1x128xf32>
    %15 = math.exp %14 : vector<1x128xf32>
    %cst_7 = arith.constant 1.000000e+00 : f32
    %16 = vector.broadcast %cst_7 : f32 to vector<1x128xf32>
    %17 = arith.addf %16, %15 : vector<1x128xf32>
    %18 = arith.divf %16, %17 : vector<1x128xf32>
    %19 = vector.extract_strided_slice %18 {offsets = [0, 0], sizes = [1, 32], strides = [1, 1]} : vector<1x128xf32> to vector<1x32xf32>
    %20 = vector.extract_strided_slice %18 {offsets = [0, 32], sizes = [1, 32], strides = [1, 1]} : vector<1x128xf32> to vector<1x32xf32>
    %21 = vector.extract_strided_slice %18 {offsets = [0, 64], sizes = [1, 32], strides = [1, 1]} : vector<1x128xf32> to vector<1x32xf32>
    %cst_8 = arith.constant 2.000000e+00 : f32
    %22 = vector.broadcast %cst_8 : f32 to vector<1x32xf32>
    %23 = arith.mulf %22, %21 : vector<1x32xf32>
    %cst_9 = arith.constant 1.000000e+00 : f32
    %24 = vector.broadcast %cst_9 : f32 to vector<1x32xf32>
    %25 = arith.subf %23, %24 : vector<1x32xf32>
    %26 = vector.extract_strided_slice %18 {offsets = [0, 96], sizes = [1, 32], strides = [1, 1]} : vector<1x128xf32> to vector<1x32xf32>
    %27 = arith.mulf %20, %10 : vector<1x32xf32>
    %28 = arith.mulf %19, %25 : vector<1x32xf32>
    %29 = arith.addf %27, %28 : vector<1x32xf32>
    %30 = math.tanh %29 : vector<1x32xf32>
    %31 = arith.mulf %26, %30 : vector<1x32xf32>
    %32 = vector.extract_strided_slice %8 {offsets = [1, 0], sizes = [1, 128], strides = [1, 1]} : vector<8x128xf32> to vector<1x128xf32>
    %cst_10 = arith.constant dense<0.000000e+00> : vector<1x128xf32>
    %33 = tpu.matmul %31, %0, %cst_10 {dimension_numbers = #tpu.dot_dimension_numbers<[1], [0], [0], [1], [0, 0, 1, 1], [], []>} : vector<1x32xf32>, vector<32x128xf32>, vector<1x128xf32> -> vector<1x128xf32>
    %34 = arith.addf %32, %33 : vector<1x128xf32>
    %35 = arith.negf %34 : vector<1x128xf32>
    %36 = math.exp %35 : vector<1x128xf32>
    %cst_11 = arith.constant 1.000000e+00 : f32
    %37 = vector.broadcast %cst_11 : f32 to vector<1x128xf32>
    %38 = arith.addf %37, %36 : vector<1x128xf32>
    %39 = arith.divf %37, %38 : vector<1x128xf32>
    %40 = vector.extract_strided_slice %39 {offsets = [0, 0], sizes = [1, 32], strides = [1, 1]} : vector<1x128xf32> to vector<1x32xf32>
    %41 = vector.extract_strided_slice %39 {offsets = [0, 32], sizes = [1, 32], strides = [1, 1]} : vector<1x128xf32> to vector<1x32xf32>
    %42 = vector.extract_strided_slice %39 {offsets = [0, 64], sizes = [1, 32], strides = [1, 1]} : vector<1x128xf32> to vector<1x32xf32>
    %cst_12 = arith.constant 2.000000e+00 : f32
    %43 = vector.broadcast %cst_12 : f32 to vector<1x32xf32>
    %44 = arith.mulf %43, %42 : vector<1x32xf32>
    %cst_13 = arith.constant 1.000000e+00 : f32
    %45 = vector.broadcast %cst_13 : f32 to vector<1x32xf32>
    %46 = arith.subf %44, %45 : vector<1x32xf32>
    %47 = vector.extract_strided_slice %39 {offsets = [0, 96], sizes = [1, 32], strides = [1, 1]} : vector<1x128xf32> to vector<1x32xf32>
    %48 = arith.mulf %41, %29 : vector<1x32xf32>
    %49 = arith.mulf %40, %46 : vector<1x32xf32>
    %50 = arith.addf %48, %49 : vector<1x32xf32>
    %51 = math.tanh %50 : vector<1x32xf32>
    %52 = arith.mulf %47, %51 : vector<1x32xf32>
    %53 = vector.extract_strided_slice %8 {offsets = [2, 0], sizes = [1, 128], strides = [1, 1]} : vector<8x128xf32> to vector<1x128xf32>
    %cst_14 = arith.constant dense<0.000000e+00> : vector<1x128xf32>
    %54 = tpu.matmul %52, %0, %cst_14 {dimension_numbers = #tpu.dot_dimension_numbers<[1], [0], [0], [1], [0, 0, 1, 1], [], []>} : vector<1x32xf32>, vector<32x128xf32>, vector<1x128xf32> -> vector<1x128xf32>
    %55 = arith.addf %53, %54 : vector<1x128xf32>
    %56 = arith.negf %55 : vector<1x128xf32>
    %57 = math.exp %56 : vector<1x128xf32>
    %cst_15 = arith.constant 1.000000e+00 : f32
    %58 = vector.broadcast %cst_15 : f32 to vector<1x128xf32>
    %59 = arith.addf %58, %57 : vector<1x128xf32>
    %60 = arith.divf %58, %59 : vector<1x128xf32>
    %61 = vector.extract_strided_slice %60 {offsets = [0, 0], sizes = [1, 32], strides = [1, 1]} : vector<1x128xf32> to vector<1x32xf32>
    %62 = vector.extract_strided_slice %60 {offsets = [0, 32], sizes = [1, 32], strides = [1, 1]} : vector<1x128xf32> to vector<1x32xf32>
    %63 = vector.extract_strided_slice %60 {offsets = [0, 64], sizes = [1, 32], strides = [1, 1]} : vector<1x128xf32> to vector<1x32xf32>
    %cst_16 = arith.constant 2.000000e+00 : f32
    %64 = vector.broadcast %cst_16 : f32 to vector<1x32xf32>
    %65 = arith.mulf %64, %63 : vector<1x32xf32>
    %cst_17 = arith.constant 1.000000e+00 : f32
    %66 = vector.broadcast %cst_17 : f32 to vector<1x32xf32>
    %67 = arith.subf %65, %66 : vector<1x32xf32>
    %68 = vector.extract_strided_slice %60 {offsets = [0, 96], sizes = [1, 32], strides = [1, 1]} : vector<1x128xf32> to vector<1x32xf32>
    %69 = arith.mulf %62, %50 : vector<1x32xf32>
    %70 = arith.mulf %61, %67 : vector<1x32xf32>
    %71 = arith.addf %69, %70 : vector<1x32xf32>
    %72 = math.tanh %71 : vector<1x32xf32>
    %73 = arith.mulf %68, %72 : vector<1x32xf32>
    %74 = vector.extract_strided_slice %8 {offsets = [3, 0], sizes = [1, 128], strides = [1, 1]} : vector<8x128xf32> to vector<1x128xf32>
    %cst_18 = arith.constant dense<0.000000e+00> : vector<1x128xf32>
    %75 = tpu.matmul %73, %0, %cst_18 {dimension_numbers = #tpu.dot_dimension_numbers<[1], [0], [0], [1], [0, 0, 1, 1], [], []>} : vector<1x32xf32>, vector<32x128xf32>, vector<1x128xf32> -> vector<1x128xf32>
    %76 = arith.addf %74, %75 : vector<1x128xf32>
    %77 = arith.negf %76 : vector<1x128xf32>
    %78 = math.exp %77 : vector<1x128xf32>
    %cst_19 = arith.constant 1.000000e+00 : f32
    %79 = vector.broadcast %cst_19 : f32 to vector<1x128xf32>
    %80 = arith.addf %79, %78 : vector<1x128xf32>
    %81 = arith.divf %79, %80 : vector<1x128xf32>
    %82 = vector.extract_strided_slice %81 {offsets = [0, 0], sizes = [1, 32], strides = [1, 1]} : vector<1x128xf32> to vector<1x32xf32>
    %83 = vector.extract_strided_slice %81 {offsets = [0, 32], sizes = [1, 32], strides = [1, 1]} : vector<1x128xf32> to vector<1x32xf32>
    %84 = vector.extract_strided_slice %81 {offsets = [0, 64], sizes = [1, 32], strides = [1, 1]} : vector<1x128xf32> to vector<1x32xf32>
    %cst_20 = arith.constant 2.000000e+00 : f32
    %85 = vector.broadcast %cst_20 : f32 to vector<1x32xf32>
    %86 = arith.mulf %85, %84 : vector<1x32xf32>
    %cst_21 = arith.constant 1.000000e+00 : f32
    %87 = vector.broadcast %cst_21 : f32 to vector<1x32xf32>
    %88 = arith.subf %86, %87 : vector<1x32xf32>
    %89 = vector.extract_strided_slice %81 {offsets = [0, 96], sizes = [1, 32], strides = [1, 1]} : vector<1x128xf32> to vector<1x32xf32>
    %90 = arith.mulf %83, %71 : vector<1x32xf32>
    %91 = arith.mulf %82, %88 : vector<1x32xf32>
    %92 = arith.addf %90, %91 : vector<1x32xf32>
    %93 = math.tanh %92 : vector<1x32xf32>
    %94 = arith.mulf %89, %93 : vector<1x32xf32>
    %95 = vector.extract_strided_slice %8 {offsets = [4, 0], sizes = [1, 128], strides = [1, 1]} : vector<8x128xf32> to vector<1x128xf32>
    %cst_22 = arith.constant dense<0.000000e+00> : vector<1x128xf32>
    %96 = tpu.matmul %94, %0, %cst_22 {dimension_numbers = #tpu.dot_dimension_numbers<[1], [0], [0], [1], [0, 0, 1, 1], [], []>} : vector<1x32xf32>, vector<32x128xf32>, vector<1x128xf32> -> vector<1x128xf32>
    %97 = arith.addf %95, %96 : vector<1x128xf32>
    %98 = arith.negf %97 : vector<1x128xf32>
    %99 = math.exp %98 : vector<1x128xf32>
    %cst_23 = arith.constant 1.000000e+00 : f32
    %100 = vector.broadcast %cst_23 : f32 to vector<1x128xf32>
    %101 = arith.addf %100, %99 : vector<1x128xf32>
    %102 = arith.divf %100, %101 : vector<1x128xf32>
    %103 = vector.extract_strided_slice %102 {offsets = [0, 0], sizes = [1, 32], strides = [1, 1]} : vector<1x128xf32> to vector<1x32xf32>
    %104 = vector.extract_strided_slice %102 {offsets = [0, 32], sizes = [1, 32], strides = [1, 1]} : vector<1x128xf32> to vector<1x32xf32>
    %105 = vector.extract_strided_slice %102 {offsets = [0, 64], sizes = [1, 32], strides = [1, 1]} : vector<1x128xf32> to vector<1x32xf32>
    %cst_24 = arith.constant 2.000000e+00 : f32
    %106 = vector.broadcast %cst_24 : f32 to vector<1x32xf32>
    %107 = arith.mulf %106, %105 : vector<1x32xf32>
    %cst_25 = arith.constant 1.000000e+00 : f32
    %108 = vector.broadcast %cst_25 : f32 to vector<1x32xf32>
    %109 = arith.subf %107, %108 : vector<1x32xf32>
    %110 = vector.extract_strided_slice %102 {offsets = [0, 96], sizes = [1, 32], strides = [1, 1]} : vector<1x128xf32> to vector<1x32xf32>
    %111 = arith.mulf %104, %92 : vector<1x32xf32>
    %112 = arith.mulf %103, %109 : vector<1x32xf32>
    %113 = arith.addf %111, %112 : vector<1x32xf32>
    %114 = math.tanh %113 : vector<1x32xf32>
    %115 = arith.mulf %110, %114 : vector<1x32xf32>
    %116 = vector.extract_strided_slice %8 {offsets = [5, 0], sizes = [1, 128], strides = [1, 1]} : vector<8x128xf32> to vector<1x128xf32>
    %cst_26 = arith.constant dense<0.000000e+00> : vector<1x128xf32>
    %117 = tpu.matmul %115, %0, %cst_26 {dimension_numbers = #tpu.dot_dimension_numbers<[1], [0], [0], [1], [0, 0, 1, 1], [], []>} : vector<1x32xf32>, vector<32x128xf32>, vector<1x128xf32> -> vector<1x128xf32>
    %118 = arith.addf %116, %117 : vector<1x128xf32>
    %119 = arith.negf %118 : vector<1x128xf32>
    %120 = math.exp %119 : vector<1x128xf32>
    %cst_27 = arith.constant 1.000000e+00 : f32
    %121 = vector.broadcast %cst_27 : f32 to vector<1x128xf32>
    %122 = arith.addf %121, %120 : vector<1x128xf32>
    %123 = arith.divf %121, %122 : vector<1x128xf32>
    %124 = vector.extract_strided_slice %123 {offsets = [0, 0], sizes = [1, 32], strides = [1, 1]} : vector<1x128xf32> to vector<1x32xf32>
    %125 = vector.extract_strided_slice %123 {offsets = [0, 32], sizes = [1, 32], strides = [1, 1]} : vector<1x128xf32> to vector<1x32xf32>
    %126 = vector.extract_strided_slice %123 {offsets = [0, 64], sizes = [1, 32], strides = [1, 1]} : vector<1x128xf32> to vector<1x32xf32>
    %cst_28 = arith.constant 2.000000e+00 : f32
    %127 = vector.broadcast %cst_28 : f32 to vector<1x32xf32>
    %128 = arith.mulf %127, %126 : vector<1x32xf32>
    %cst_29 = arith.constant 1.000000e+00 : f32
    %129 = vector.broadcast %cst_29 : f32 to vector<1x32xf32>
    %130 = arith.subf %128, %129 : vector<1x32xf32>
    %131 = vector.extract_strided_slice %123 {offsets = [0, 96], sizes = [1, 32], strides = [1, 1]} : vector<1x128xf32> to vector<1x32xf32>
    %132 = arith.mulf %125, %113 : vector<1x32xf32>
    %133 = arith.mulf %124, %130 : vector<1x32xf32>
    %134 = arith.addf %132, %133 : vector<1x32xf32>
    %135 = math.tanh %134 : vector<1x32xf32>
    %136 = arith.mulf %131, %135 : vector<1x32xf32>
    %137 = vector.extract_strided_slice %8 {offsets = [6, 0], sizes = [1, 128], strides = [1, 1]} : vector<8x128xf32> to vector<1x128xf32>
    %cst_30 = arith.constant dense<0.000000e+00> : vector<1x128xf32>
    %138 = tpu.matmul %136, %0, %cst_30 {dimension_numbers = #tpu.dot_dimension_numbers<[1], [0], [0], [1], [0, 0, 1, 1], [], []>} : vector<1x32xf32>, vector<32x128xf32>, vector<1x128xf32> -> vector<1x128xf32>
    %139 = arith.addf %137, %138 : vector<1x128xf32>
    %140 = arith.negf %139 : vector<1x128xf32>
    %141 = math.exp %140 : vector<1x128xf32>
    %cst_31 = arith.constant 1.000000e+00 : f32
    %142 = vector.broadcast %cst_31 : f32 to vector<1x128xf32>
    %143 = arith.addf %142, %141 : vector<1x128xf32>
    %144 = arith.divf %142, %143 : vector<1x128xf32>
    %145 = vector.extract_strided_slice %144 {offsets = [0, 0], sizes = [1, 32], strides = [1, 1]} : vector<1x128xf32> to vector<1x32xf32>
    %146 = vector.extract_strided_slice %144 {offsets = [0, 32], sizes = [1, 32], strides = [1, 1]} : vector<1x128xf32> to vector<1x32xf32>
    %147 = vector.extract_strided_slice %144 {offsets = [0, 64], sizes = [1, 32], strides = [1, 1]} : vector<1x128xf32> to vector<1x32xf32>
    %cst_32 = arith.constant 2.000000e+00 : f32
    %148 = vector.broadcast %cst_32 : f32 to vector<1x32xf32>
    %149 = arith.mulf %148, %147 : vector<1x32xf32>
    %cst_33 = arith.constant 1.000000e+00 : f32
    %150 = vector.broadcast %cst_33 : f32 to vector<1x32xf32>
    %151 = arith.subf %149, %150 : vector<1x32xf32>
    %152 = vector.extract_strided_slice %144 {offsets = [0, 96], sizes = [1, 32], strides = [1, 1]} : vector<1x128xf32> to vector<1x32xf32>
    %153 = arith.mulf %146, %134 : vector<1x32xf32>
    %154 = arith.mulf %145, %151 : vector<1x32xf32>
    %155 = arith.addf %153, %154 : vector<1x32xf32>
    %156 = math.tanh %155 : vector<1x32xf32>
    %157 = arith.mulf %152, %156 : vector<1x32xf32>
    %158 = vector.extract_strided_slice %8 {offsets = [7, 0], sizes = [1, 128], strides = [1, 1]} : vector<8x128xf32> to vector<1x128xf32>
    %cst_34 = arith.constant dense<0.000000e+00> : vector<1x128xf32>
    %159 = tpu.matmul %157, %0, %cst_34 {dimension_numbers = #tpu.dot_dimension_numbers<[1], [0], [0], [1], [0, 0, 1, 1], [], []>} : vector<1x32xf32>, vector<32x128xf32>, vector<1x128xf32> -> vector<1x128xf32>
    %160 = arith.addf %158, %159 : vector<1x128xf32>
    %161 = arith.negf %160 : vector<1x128xf32>
    %162 = math.exp %161 : vector<1x128xf32>
    %cst_35 = arith.constant 1.000000e+00 : f32
    %163 = vector.broadcast %cst_35 : f32 to vector<1x128xf32>
    %164 = arith.addf %163, %162 : vector<1x128xf32>
    %165 = arith.divf %163, %164 : vector<1x128xf32>
    %166 = vector.extract_strided_slice %165 {offsets = [0, 0], sizes = [1, 32], strides = [1, 1]} : vector<1x128xf32> to vector<1x32xf32>
    %167 = vector.extract_strided_slice %165 {offsets = [0, 32], sizes = [1, 32], strides = [1, 1]} : vector<1x128xf32> to vector<1x32xf32>
    %168 = vector.extract_strided_slice %165 {offsets = [0, 64], sizes = [1, 32], strides = [1, 1]} : vector<1x128xf32> to vector<1x32xf32>
    %cst_36 = arith.constant 2.000000e+00 : f32
    %169 = vector.broadcast %cst_36 : f32 to vector<1x32xf32>
    %170 = arith.mulf %169, %168 : vector<1x32xf32>
    %cst_37 = arith.constant 1.000000e+00 : f32
    %171 = vector.broadcast %cst_37 : f32 to vector<1x32xf32>
    %172 = arith.subf %170, %171 : vector<1x32xf32>
    %173 = vector.extract_strided_slice %165 {offsets = [0, 96], sizes = [1, 32], strides = [1, 1]} : vector<1x128xf32> to vector<1x32xf32>
    %174 = arith.mulf %167, %155 : vector<1x32xf32>
    %175 = arith.mulf %166, %172 : vector<1x32xf32>
    %176 = arith.addf %174, %175 : vector<1x32xf32>
    %177 = math.tanh %176 : vector<1x32xf32>
    %178 = arith.mulf %173, %177 : vector<1x32xf32>
    %c48 = arith.constant 48 : index
    %c0_38 = arith.constant 0 : index
    %179 = vector.load %arg1[%c48, %c0_38] : memref<56x128xf32, #tpu.memory_space<vmem>>, vector<1x128xf32>
    %180 = vector.extract_strided_slice %179 {offsets = [0, 0], sizes = [1, 32], strides = [1, 1]} : vector<1x128xf32> to vector<1x32xf32>
    %181 = vector.extract_strided_slice %179 {offsets = [0, 32], sizes = [1, 1], strides = [1, 1]} : vector<1x128xf32> to vector<1x1xf32>
    %182 = arith.mulf %178, %180 : vector<1x32xf32>
    %cst_39 = arith.constant dense<0.000000e+00> : vector<1xf32>
    %183 = vector.multi_reduction <add>, %182, %cst_39 [1] : vector<1x32xf32> to vector<1xf32>
    %184 = vector.shape_cast %183 : vector<1xf32> to vector<1x1xf32>
    %185 = arith.addf %184, %181 : vector<1x1xf32>
    %c0_40 = arith.constant 0 : index
    %c0_41 = arith.constant 0 : index
    %186 = vector.load %arg2[%c0_40, %c0_41] : memref<1x1xf32, #tpu.memory_space<vmem>>, vector<1x1xf32>
    tpu.vector_store %arg2[%c0_40, %c0_41], %185 {strides = array<i32>} : memref<1x1xf32, #tpu.memory_space<vmem>>, vector<1x1xf32>,
    return
  }
}

</mosaic_0001>

<llo_original>
// kernel: lstm_forward.1
$region0: #{lstm_forward.1}
  #allocation0 [shape = 'u32[]', space=smem, size = 0x4, offset = 0x4, fixed_abs, tag = 'smem constant byte address 0x4 - core index']
  #allocation1 [shape = 'u32[72,128]{1,0:T(1,128)}', space=vmem, size = 0x9000, scoped, tag = 'internal scratch']
  %s0 = inlined_call_operand.vmem [shape: f32[8,1], index: 0, kind: input, shape index: {}]
  %s1 = inlined_call_operand.hbm [shape: f32[56,128], index: 1, kind: input, shape index: {}]
  %s2 = inlined_call_operand.hbm [shape: f32[1,1], index: 2, kind: output, shape index: {}]
  %s3 = sld [smem:[#allocation0]]
  $region22: #{lstm_forward.1} parent=0
    _
  %s5 = ssub.s32 1, %s3
  %s6 = scalar_select 0, %s5, %s3
  $region1: #{lstm_forward.1} parent=0
    #allocation2 [shape = 'u8[28672]{0}', space=vmem, size = 0x7000, scoped, tag = 'input window, operand 1, single buffered']
    #allocation3 [shape = 's32[1]{0}', space=sflag, size = 0x4, scoped, tag = 'scoped memory for lstm_forward.1']
    #allocation4 [shape = 's32[1]{0}', space=sflag, size = 0x4, scoped, tag = 'scoped memory for lstm_forward.1']
    #allocation5 [shape = 'u8[512]{0}', space=vmem, size = 0x400, scoped, tag = 'output window, operand 0, single buffered']
    %7 = vsyncpa [#allocation3], 0
    %8 = vsyncpa [#allocation4], 0
    // Predicated region
    $region2: #{lstm_forward.1} parent=1 // pred_check
      _
    $region3: #{lstm_forward.1} parent=1 // pred_check_branch
      %10 = sbr.rel (0) target = $region5
    $region4: #{lstm_forward.1} parent=1 // pred_region
      _
    $region5: #{lstm_forward.1} parent=1 // pred_fallthru
      _
    // Predicated region
    $region6: #{lstm_forward.1} parent=1 // pred_check
      _
    $region7: #{lstm_forward.1} parent=1 // pred_check_branch
      %12 = sbr.rel (0) target = $region9
    $region8: #{lstm_forward.1} parent=1 // pred_region
      %14 = vsyncadd [#allocation3], 0
      %s15 = sshll.u32 %s1, 4
      %s16 = int_to_ptr.hbm [resolvable:$true] %s15
      %s17 = sshll.u32 [#allocation2], 4
      %s18 = int_to_ptr.vmem [resolvable:$true] %s17
      %23 = dma.hbm_to_vmem [thread:$0]  %s16, 896, %s18, [#allocation3], 128, 128, 8
    $region9: #{lstm_forward.1} parent=1 // pred_fallthru
      _
    // Predicated region
    $region10: #{lstm_forward.1} parent=1 // pred_check
      _
    $region11: #{lstm_forward.1} parent=1 // pred_check_branch
      %25 = sbr.rel (0) target = $region13
    $region12: #{lstm_forward.1} parent=1 // pred_region
      %27 = dma.done [#allocation3], 896
    $region13: #{lstm_forward.1} parent=1 // pred_fallthru
      _
    %v28 = vld [vmem:[#allocation2] sm:$0xff]
    %v29 = vld [vmem:[#allocation2 + $0x8] sm:$0xff]
    %v30 = vld [vmem:[#allocation2 + $0x10] sm:$0xff]
    %v31 = vld [vmem:[#allocation2 + $0x18] sm:$0xff]
    %v32 = vld [vmem:[#allocation2 + $0x28] sm:$0x1]
    %v33 = vld [vmem:[#allocation2 + $0x20] sm:$0x1]
    %v34 = vld [vmem:[%s0] sm:$0xff]
    %36 = vset.pattern.permute.xlu0 0
    %37 = vperm.xlu0 %36, %v34
    %v38 = vpop.permute.xlu0 %37
    %v40 = vperm.slane %v33, 0
    %v41 = vmul.f32 %v38, %v40
    %v42 = vperm.slane %v32, 0
    %v43 = vadd.f32 %v41, %v42
    %vm44 = vcmask 261120
    %v46 = vsel %vm44, 0.0, 0
    %48 = vmatpush.msra.mxu0 0.0
    %49 = vmatpush.msra.mxu0 0.0
    %50 = vmatpush.msra.mxu0 0.0
    %51 = vmatpush.msra.mxu0 0.0
    %52 = vmatpush.msra.mxu0 0.0
    %53 = vmatpush.msra.mxu0 0.0
    %54 = vmatpush.msra.mxu0 0.0
    %55 = vmatpush.msra.mxu0 0.0
    %56 = vmatpush.msra.mxu0 0.0
    %57 = vmatpush.msra.mxu0 0.0
    %58 = vmatpush.msra.mxu0 0.0
    %59 = vmatpush.msra.mxu0 0.0
    %60 = vmatpush.msra.mxu0 %v31
    %61 = vmatpush.msra.mxu0 %v30
    %62 = vmatpush.msra.mxu0 %v29
    %63 = vmatpush.msra.mxu0 %v28
    %64 = vmatmul.f32.gmra.mxu0 %v46
    %v65 = vpop.f32.mrf.mxu0
    %v66 = vadd.f32 0.0, %v65
    %67 = vdwg.mxu0
    %v68 = vadd.f32 %v43, %v66
    %v69 = vxor.u32 %v68, 2147483648
    %v70 = vmul.f32 %v69, 1.442695
    %v71 = vpow.pop %v70
    %v72 = vadd.f32 %v71, 1.0
    %v73 = vrcp.pop %v72
    %v74 = vmul.f32 %v72, %v73
    %v75 = vsub.f32 1.0, %v74
    %v76 = vmul.f32 %v73, %v75
    %v77 = vadd.f32 %v73, %v76
    %vm78 = vweird.f32 %v72
    %vm79 = vweird.f32 %v73
    %vm80 = vmor %vm78, %vm79
    %v81 = vsel %vm80, %v73, %v77
    %v82 = vand.u32 2147483647, %v72
    %vm83 = vcmp.eq.f32.partialorder %v82, 8.507059e+37
    %v84 = vand.u32 %v72, 2147483648
    %v85 = vor.u32 1.1754944e-38, %v84
    %v86 = vsel %vm83, %v85, %v81
    %v87 = vmul.f32 1.0, %v86
    %v88 = vmul.f32 %v87, 2.0
    %v89 = vsub.f32 %v88, 1.0
    %v90 = vmul.f32 %v87, 0.0
    %92 = vrot.lane.b32.xlu0 %v89, 64
    %v93 = vpop.permute.xlu0 %92
    %v95 = vmul.f32 %v87, %v93
    %97 = vrot.lane.b32.xlu0 %v95, 32
    %v98 = vpop.permute.xlu0 %97
    %v100 = vadd.f32 %v90, %v98
    %v101 = vtanh.pop %v100
    %103 = vrot.lane.b32.xlu0 %v101, 64
    %v104 = vpop.permute.xlu0 %103
    %v106 = vmul.f32 %v87, %v104
    %108 = vrot.lane.b32.xlu0 %v106, 32
    %v109 = vpop.permute.xlu0 %108
    %v110 = vsel %vm44, %v109, 0
    %112 = vmatpush.msra.mxu0 0.0
    %113 = vmatpush.msra.mxu0 0.0
    %114 = vmatpush.msra.mxu0 0.0
    %115 = vmatpush.msra.mxu0 0.0
    %116 = vmatpush.msra.mxu0 0.0
    %117 = vmatpush.msra.mxu0 0.0
    %118 = vmatpush.msra.mxu0 0.0
    %119 = vmatpush.msra.mxu0 0.0
    %120 = vmatpush.msra.mxu0 0.0
    %121 = vmatpush.msra.mxu0 0.0
    %122 = vmatpush.msra.mxu0 0.0
    %123 = vmatpush.msra.mxu0 0.0
    %124 = vmatpush.msra.mxu0 %v31
    %125 = vmatpush.msra.mxu0 %v30
    %126 = vmatpush.msra.mxu0 %v29
    %127 = vmatpush.msra.mxu0 %v28
    %128 = vmatmul.f32.gmra.mxu0 %v110
    %v129 = vpop.f32.mrf.mxu0
    %v130 = vadd.f32 0.0, %v129
    %131 = vdwg.mxu0
    %v133 = vrot.slane %v130, 7
    %v135 = vadd.f32 %v43, %v133
    %v136 = vxor.u32 %v135, 2147483648
    %v137 = vmul.f32 %v136, 1.442695
    %v138 = vpow.pop %v137
    %v139 = vadd.f32 %v138, 1.0
    %v140 = vrcp.pop %v139
    %v141 = vmul.f32 %v139, %v140
    %v142 = vsub.f32 1.0, %v141
    %v143 = vmul.f32 %v140, %v142
    %v144 = vadd.f32 %v140, %v143
    %vm145 = vweird.f32 %v139
    %vm146 = vweird.f32 %v140
    %vm147 = vmor %vm145, %vm146
    %v148 = vsel %vm147, %v140, %v144
    %v149 = vand.u32 2147483647, %v139
    %vm150 = vcmp.eq.f32.partialorder %v149, 8.507059e+37
    %v151 = vand.u32 %v139, 2147483648
    %v152 = vor.u32 1.1754944e-38, %v151
    %v153 = vsel %vm150, %v152, %v148
    %v154 = vmul.f32 1.0, %v153
    %v155 = vmul.f32 %v154, 2.0
    %v156 = vsub.f32 %v155, 1.0
    %v158 = vrot.slane %v100, 7
    %v160 = vmul.f32 %v154, %v158
    %162 = vrot.lane.b32.xlu0 %v156, 64
    %v163 = vpop.permute.xlu0 %162
    %v165 = vmul.f32 %v154, %v163
    %167 = vrot.lane.b32.xlu0 %v165, 32
    %v168 = vpop.permute.xlu0 %167
    %v170 = vadd.f32 %v160, %v168
    %v171 = vtanh.pop %v170
    %173 = vrot.lane.b32.xlu0 %v171, 64
    %v174 = vpop.permute.xlu0 %173
    %v176 = vmul.f32 %v154, %v174
    %v178 = vrot.slane %v176, 1
    %179 = vrot.lane.b32.xlu0 %v178, 32
    %v180 = vpop.permute.xlu0 %179
    %v181 = vsel %vm44, %v180, 0
    %183 = vmatpush.msra.mxu0 0.0
    %184 = vmatpush.msra.mxu0 0.0
    %185 = vmatpush.msra.mxu0 0.0
    %186 = vmatpush.msra.mxu0 0.0
    %187 = vmatpush.msra.mxu0 0.0
    %188 = vmatpush.msra.mxu0 0.0
    %189 = vmatpush.msra.mxu0 0.0
    %190 = vmatpush.msra.mxu0 0.0
    %191 = vmatpush.msra.mxu0 0.0
    %192 = vmatpush.msra.mxu0 0.0
    %193 = vmatpush.msra.mxu0 0.0
    %194 = vmatpush.msra.mxu0 0.0
    %195 = vmatpush.msra.mxu0 %v31
    %196 = vmatpush.msra.mxu0 %v30
    %197 = vmatpush.msra.mxu0 %v29
    %198 = vmatpush.msra.mxu0 %v28
    %199 = vmatmul.f32.gmra.mxu0 %v181
    %v200 = vpop.f32.mrf.mxu0
    %v201 = vadd.f32 0.0, %v200
    %202 = vdwg.mxu0
    %v204 = vrot.slane %v201, 6
    %v206 = vadd.f32 %v43, %v204
    %v207 = vxor.u32 %v206, 2147483648
    %v208 = vmul.f32 %v207, 1.442695
    %v209 = vpow.pop %v208
    %v210 = vadd.f32 %v209, 1.0
    %v211 = vrcp.pop %v210
    %v212 = vmul.f32 %v210, %v211
    %v213 = vsub.f32 1.0, %v212
    %v214 = vmul.f32 %v211, %v213
    %v215 = vadd.f32 %v211, %v214
    %vm216 = vweird.f32 %v210
    %vm217 = vweird.f32 %v211
    %vm218 = vmor %vm216, %vm217
    %v219 = vsel %vm218, %v211, %v215
    %v220 = vand.u32 2147483647, %v210
    %vm221 = vcmp.eq.f32.partialorder %v220, 8.507059e+37
    %v222 = vand.u32 %v210, 2147483648
    %v223 = vor.u32 1.1754944e-38, %v222
    %v224 = vsel %vm221, %v223, %v219
    %v225 = vmul.f32 1.0, %v224
    %v226 = vmul.f32 %v225, 2.0
    %v227 = vsub.f32 %v226, 1.0
    %v229 = vrot.slane %v170, 7
    %v231 = vmul.f32 %v225, %v229
    %233 = vrot.lane.b32.xlu0 %v227, 64
    %v234 = vpop.permute.xlu0 %233
    %v236 = vmul.f32 %v225, %v234
    %238 = vrot.lane.b32.xlu0 %v236, 32
    %v239 = vpop.permute.xlu0 %238
    %v241 = vadd.f32 %v231, %v239
    %v242 = vtanh.pop %v241
    %244 = vrot.lane.b32.xlu0 %v242, 64
    %v245 = vpop.permute.xlu0 %244
    %v247 = vmul.f32 %v225, %v245
    %v249 = vrot.slane %v247, 2
    %250 = vrot.lane.b32.xlu0 %v249, 32
    %v251 = vpop.permute.xlu0 %250
    %v252 = vsel %vm44, %v251, 0
    %254 = vmatpush.msra.mxu0 0.0
    %255 = vmatpush.msra.mxu0 0.0
    %256 = vmatpush.msra.mxu0 0.0
    %257 = vmatpush.msra.mxu0 0.0
    %258 = vmatpush.msra.mxu0 0.0
    %259 = vmatpush.msra.mxu0 0.0
    %260 = vmatpush.msra.mxu0 0.0
    %261 = vmatpush.msra.mxu0 0.0
    %262 = vmatpush.msra.mxu0 0.0
    %263 = vmatpush.msra.mxu0 0.0
    %264 = vmatpush.msra.mxu0 0.0
    %265 = vmatpush.msra.mxu0 0.0
    %266 = vmatpush.msra.mxu0 %v31
    %267 = vmatpush.msra.mxu0 %v30
    %268 = vmatpush.msra.mxu0 %v29
    %269 = vmatpush.msra.mxu0 %v28
    %270 = vmatmul.f32.gmra.mxu0 %v252
    %v271 = vpop.f32.mrf.mxu0
    %v272 = vadd.f32 0.0, %v271
    %273 = vdwg.mxu0
    %v275 = vrot.slane %v272, 5
    %v277 = vadd.f32 %v43, %v275
    %v278 = vxor.u32 %v277, 2147483648
    %v279 = vmul.f32 %v278, 1.442695
    %v280 = vpow.pop %v279
    %v281 = vadd.f32 %v280, 1.0
    %v282 = vrcp.pop %v281
    %v283 = vmul.f32 %v281, %v282
    %v284 = vsub.f32 1.0, %v283
    %v285 = vmul.f32 %v282, %v284
    %v286 = vadd.f32 %v282, %v285
    %vm287 = vweird.f32 %v281
    %vm288 = vweird.f32 %v282
    %vm289 = vmor %vm287, %vm288
    %v290 = vsel %vm289, %v282, %v286
    %v291 = vand.u32 2147483647, %v281
    %vm292 = vcmp.eq.f32.partialorder %v291, 8.507059e+37
    %v293 = vand.u32 %v281, 2147483648
    %v294 = vor.u32 1.1754944e-38, %v293
    %v295 = vsel %vm292, %v294, %v290
    %v296 = vmul.f32 1.0, %v295
    %v297 = vmul.f32 %v296, 2.0
    %v298 = vsub.f32 %v297, 1.0
    %v300 = vrot.slane %v241, 7
    %v302 = vmul.f32 %v296, %v300
    %304 = vrot.lane.b32.xlu0 %v298, 64
    %v305 = vpop.permute.xlu0 %304
    %v307 = vmul.f32 %v296, %v305
    %309 = vrot.lane.b32.xlu0 %v307, 32
    %v310 = vpop.permute.xlu0 %309
    %v312 = vadd.f32 %v302, %v310
    %v313 = vtanh.pop %v312
    %315 = vrot.lane.b32.xlu0 %v313, 64
    %v316 = vpop.permute.xlu0 %315
    %v318 = vmul.f32 %v296, %v316
    %v320 = vrot.slane %v318, 3
    %321 = vrot.lane.b32.xlu0 %v320, 32
    %v322 = vpop.permute.xlu0 %321
    %v323 = vsel %vm44, %v322, 0
    %325 = vmatpush.msra.mxu0 0.0
    %326 = vmatpush.msra.mxu0 0.0
    %327 = vmatpush.msra.mxu0 0.0
    %328 = vmatpush.msra.mxu0 0.0
    %329 = vmatpush.msra.mxu0 0.0
    %330 = vmatpush.msra.mxu0 0.0
    %331 = vmatpush.msra.mxu0 0.0
    %332 = vmatpush.msra.mxu0 0.0
    %333 = vmatpush.msra.mxu0 0.0
    %334 = vmatpush.msra.mxu0 0.0
    %335 = vmatpush.msra.mxu0 0.0
    %336 = vmatpush.msra.mxu0 0.0
    %337 = vmatpush.msra.mxu0 %v31
    %338 = vmatpush.msra.mxu0 %v30
    %339 = vmatpush.msra.mxu0 %v29
    %340 = vmatpush.msra.mxu0 %v28
    %341 = vmatmul.f32.gmra.mxu0 %v323
    %v342 = vpop.f32.mrf.mxu0
    %v343 = vadd.f32 0.0, %v342
    %344 = vdwg.mxu0
    %v346 = vrot.slane %v343, 4
    %v348 = vadd.f32 %v43, %v346
    %v349 = vxor.u32 %v348, 2147483648
    %v350 = vmul.f32 %v349, 1.442695
    %v351 = vpow.pop %v350
    %v352 = vadd.f32 %v351, 1.0
    %v353 = vrcp.pop %v352
    %v354 = vmul.f32 %v352, %v353
    %v355 = vsub.f32 1.0, %v354
    %v356 = vmul.f32 %v353, %v355
    %v357 = vadd.f32 %v353, %v356
    %vm358 = vweird.f32 %v352
    %vm359 = vweird.f32 %v353
    %vm360 = vmor %vm358, %vm359
    %v361 = vsel %vm360, %v353, %v357
    %v362 = vand.u32 2147483647, %v352
    %vm363 = vcmp.eq.f32.partialorder %v362, 8.507059e+37
    %v364 = vand.u32 %v352, 2147483648
    %v365 = vor.u32 1.1754944e-38, %v364
    %v366 = vsel %vm363, %v365, %v361
    %v367 = vmul.f32 1.0, %v366
    %v368 = vmul.f32 %v367, 2.0
    %v369 = vsub.f32 %v368, 1.0
    %v371 = vrot.slane %v312, 7
    %v373 = vmul.f32 %v367, %v371
    %375 = vrot.lane.b32.xlu0 %v369, 64
    %v376 = vpop.permute.xlu0 %375
    %v378 = vmul.f32 %v367, %v376
    %380 = vrot.lane.b32.xlu0 %v378, 32
    %v381 = vpop.permute.xlu0 %380
    %v383 = vadd.f32 %v373, %v381
    %v384 = vtanh.pop %v383
    %386 = vrot.lane.b32.xlu0 %v384, 64
    %v387 = vpop.permute.xlu0 %386
    %v389 = vmul.f32 %v367, %v387
    %v391 = vrot.slane %v389, 4
    %392 = vrot.lane.b32.xlu0 %v391, 32
    %v393 = vpop.permute.xlu0 %392
    %v394 = vsel %vm44, %v393, 0
    %396 = vmatpush.msra.mxu0 0.0
    %397 = vmatpush.msra.mxu0 0.0
    %398 = vmatpush.msra.mxu0 0.0
    %399 = vmatpush.msra.mxu0 0.0
    %400 = vmatpush.msra.mxu0 0.0
    %401 = vmatpush.msra.mxu0 0.0
    %402 = vmatpush.msra.mxu0 0.0
    %403 = vmatpush.msra.mxu0 0.0
    %404 = vmatpush.msra.mxu0 0.0
    %405 = vmatpush.msra.mxu0 0.0
    %406 = vmatpush.msra.mxu0 0.0
    %407 = vmatpush.msra.mxu0 0.0
    %408 = vmatpush.msra.mxu0 %v31
    %409 = vmatpush.msra.mxu0 %v30
    %410 = vmatpush.msra.mxu0 %v29
    %411 = vmatpush.msra.mxu0 %v28
    %412 = vmatmul.f32.gmra.mxu0 %v394
    %v413 = vpop.f32.mrf.mxu0
    %v414 = vadd.f32 0.0, %v413
    %415 = vdwg.mxu0
    %v417 = vrot.slane %v414, 3
    %v419 = vadd.f32 %v43, %v417
    %v420 = vxor.u32 %v419, 2147483648
    %v421 = vmul.f32 %v420, 1.442695
    %v422 = vpow.pop %v421
    %v423 = vadd.f32 %v422, 1.0
    %v424 = vrcp.pop %v423
    %v425 = vmul.f32 %v423, %v424
    %v426 = vsub.f32 1.0, %v425
    %v427 = vmul.f32 %v424, %v426
    %v428 = vadd.f32 %v424, %v427
    %vm429 = vweird.f32 %v423
    %vm430 = vweird.f32 %v424
    %vm431 = vmor %vm429, %vm430
    %v432 = vsel %vm431, %v424, %v428
    %v433 = vand.u32 2147483647, %v423
    %vm434 = vcmp.eq.f32.partialorder %v433, 8.507059e+37
    %v435 = vand.u32 %v423, 2147483648
    %v436 = vor.u32 1.1754944e-38, %v435
    %v437 = vsel %vm434, %v436, %v432
    %v438 = vmul.f32 1.0, %v437
    %v439 = vmul.f32 %v438, 2.0
    %v440 = vsub.f32 %v439, 1.0
    %v442 = vrot.slane %v383, 7
    %v444 = vmul.f32 %v438, %v442
    %446 = vrot.lane.b32.xlu0 %v440, 64
    %v447 = vpop.permute.xlu0 %446
    %v449 = vmul.f32 %v438, %v447
    %451 = vrot.lane.b32.xlu0 %v449, 32
    %v452 = vpop.permute.xlu0 %451
    %v454 = vadd.f32 %v444, %v452
    %v455 = vtanh.pop %v454
    %457 = vrot.lane.b32.xlu0 %v455, 64
    %v458 = vpop.permute.xlu0 %457
    %v460 = vmul.f32 %v438, %v458
    %v462 = vrot.slane %v460, 5
    %463 = vrot.lane.b32.xlu0 %v462, 32
    %v464 = vpop.permute.xlu0 %463
    %v465 = vsel %vm44, %v464, 0
    %467 = vmatpush.msra.mxu0 0.0
    %468 = vmatpush.msra.mxu0 0.0
    %469 = vmatpush.msra.mxu0 0.0
    %470 = vmatpush.msra.mxu0 0.0
    %471 = vmatpush.msra.mxu0 0.0
    %472 = vmatpush.msra.mxu0 0.0
    %473 = vmatpush.msra.mxu0 0.0
    %474 = vmatpush.msra.mxu0 0.0
    %475 = vmatpush.msra.mxu0 0.0
    %476 = vmatpush.msra.mxu0 0.0
    %477 = vmatpush.msra.mxu0 0.0
    %478 = vmatpush.msra.mxu0 0.0
    %479 = vmatpush.msra.mxu0 %v31
    %480 = vmatpush.msra.mxu0 %v30
    %481 = vmatpush.msra.mxu0 %v29
    %482 = vmatpush.msra.mxu0 %v28
    %483 = vmatmul.f32.gmra.mxu0 %v465
    %v484 = vpop.f32.mrf.mxu0
    %v485 = vadd.f32 0.0, %v484
    %486 = vdwg.mxu0
    %v488 = vrot.slane %v485, 2
    %v490 = vadd.f32 %v43, %v488
    %v491 = vxor.u32 %v490, 2147483648
    %v492 = vmul.f32 %v491, 1.442695
    %v493 = vpow.pop %v492
    %v494 = vadd.f32 %v493, 1.0
    %v495 = vrcp.pop %v494
    %v496 = vmul.f32 %v494, %v495
    %v497 = vsub.f32 1.0, %v496
    %v498 = vmul.f32 %v495, %v497
    %v499 = vadd.f32 %v495, %v498
    %vm500 = vweird.f32 %v494
    %vm501 = vweird.f32 %v495
    %vm502 = vmor %vm500, %vm501
    %v503 = vsel %vm502, %v495, %v499
    %v504 = vand.u32 2147483647, %v494
    %vm505 = vcmp.eq.f32.partialorder %v504, 8.507059e+37
    %v506 = vand.u32 %v494, 2147483648
    %v507 = vor.u32 1.1754944e-38, %v506
    %v508 = vsel %vm505, %v507, %v503
    %v509 = vmul.f32 1.0, %v508
    %v510 = vmul.f32 %v509, 2.0
    %v511 = vsub.f32 %v510, 1.0
    %v513 = vrot.slane %v454, 7
    %v515 = vmul.f32 %v509, %v513
    %517 = vrot.lane.b32.xlu0 %v511, 64
    %v518 = vpop.permute.xlu0 %517
    %v520 = vmul.f32 %v509, %v518
    %522 = vrot.lane.b32.xlu0 %v520, 32
    %v523 = vpop.permute.xlu0 %522
    %v525 = vadd.f32 %v515, %v523
    %v526 = vtanh.pop %v525
    %528 = vrot.lane.b32.xlu0 %v526, 64
    %v529 = vpop.permute.xlu0 %528
    %v531 = vmul.f32 %v509, %v529
    %v533 = vrot.slane %v531, 6
    %534 = vrot.lane.b32.xlu0 %v533, 32
    %v535 = vpop.permute.xlu0 %534
    %v536 = vsel %vm44, %v535, 0
    %538 = vmatpush.msra.mxu0 0.0
    %539 = vmatpush.msra.mxu0 0.0
    %540 = vmatpush.msra.mxu0 0.0
    %541 = vmatpush.msra.mxu0 0.0
    %542 = vmatpush.msra.mxu0 0.0
    %543 = vmatpush.msra.mxu0 0.0
    %544 = vmatpush.msra.mxu0 0.0
    %545 = vmatpush.msra.mxu0 0.0
    %546 = vmatpush.msra.mxu0 0.0
    %547 = vmatpush.msra.mxu0 0.0
    %548 = vmatpush.msra.mxu0 0.0
    %549 = vmatpush.msra.mxu0 0.0
    %550 = vmatpush.msra.mxu0 %v31
    %551 = vmatpush.msra.mxu0 %v30
    %552 = vmatpush.msra.mxu0 %v29
    %553 = vmatpush.msra.mxu0 %v28
    %554 = vmatmul.f32.gmra.mxu0 %v536
    %v555 = vpop.f32.mrf.mxu0
    %v556 = vadd.f32 0.0, %v555
    %557 = vdwg.mxu0
    %v559 = vrot.slane %v556, 1
    %v561 = vadd.f32 %v43, %v559
    %v562 = vxor.u32 %v561, 2147483648
    %v563 = vmul.f32 %v562, 1.442695
    %v564 = vpow.pop %v563
    %v565 = vadd.f32 %v564, 1.0
    %v566 = vrcp.pop %v565
    %v567 = vmul.f32 %v565, %v566
    %v568 = vsub.f32 1.0, %v567
    %v569 = vmul.f32 %v566, %v568
    %v570 = vadd.f32 %v566, %v569
    %vm571 = vweird.f32 %v565
    %vm572 = vweird.f32 %v566
    %vm573 = vmor %vm571, %vm572
    %v574 = vsel %vm573, %v566, %v570
    %v575 = vand.u32 2147483647, %v565
    %vm576 = vcmp.eq.f32.partialorder %v575, 8.507059e+37
    %v577 = vand.u32 %v565, 2147483648
    %v578 = vor.u32 1.1754944e-38, %v577
    %v579 = vsel %vm576, %v578, %v574
    %v580 = vmul.f32 1.0, %v579
    %v581 = vmul.f32 %v580, 2.0
    %v582 = vsub.f32 %v581, 1.0
    %v584 = vrot.slane %v525, 7
    %v586 = vmul.f32 %v580, %v584
    %588 = vrot.lane.b32.xlu0 %v582, 64
    %v589 = vpop.permute.xlu0 %588
    %v591 = vmul.f32 %v580, %v589
    %593 = vrot.lane.b32.xlu0 %v591, 32
    %v594 = vpop.permute.xlu0 %593
    %v596 = vadd.f32 %v586, %v594
    %v597 = vtanh.pop %v596
    %599 = vrot.lane.b32.xlu0 %v597, 64
    %v600 = vpop.permute.xlu0 %599
    %v602 = vmul.f32 %v580, %v600
    %v603 = vld [vmem:[#allocation2 + $0x30] sm:$0x1]
    %v605 = vrot.slane %v603, 1
    %606 = vrot.lane.b32.xlu0 %v605, 96
    %v607 = vpop.permute.xlu0 %606
    %v609 = vmul.f32 %v602, %v607
    %611 = vrot.lane.b32.xlu0 %v609, 32
    %v612 = vpop.permute.xlu0 %611
    %vm614 = vcmask 261127
    %v615 = vsel %vm614, %v612, 0.0
    %616 = vadd.xlane.f32.xlu0 %v615
    %v617 = vpop.xlane.xlu0 %616
    %v618 = vadd.f32 %v617, %v607
    %vm619 = vcmask 7175
    %620 = vst.msk [vmem:[#allocation5 - $0x7] sm:$0x80] %vm619, %v618
    // Predicated region
    $region14: #{lstm_forward.1} parent=1 // pred_check
      _
    $region15: #{lstm_forward.1} parent=1 // pred_check_branch
      %622 = sbr.rel (0) target = $region17
    $region16: #{lstm_forward.1} parent=1 // pred_region
      %624 = vsyncadd [#allocation4], 0
      %s626 = sshll.u32 [#allocation5], 4
      %s627 = int_to_ptr.vmem [resolvable:$true] %s626
      %s628 = sshll.u32 %s2, 4
      %s629 = int_to_ptr.hbm [resolvable:$true] %s628
      %631 = dma.vmem_to_hbm [thread:$0]  %s627, 16, %s629, [#allocation4]
    $region17: #{lstm_forward.1} parent=1 // pred_fallthru
      _
    // Predicated region
    $region18: #{lstm_forward.1} parent=1 // pred_check
      _
    $region19: #{lstm_forward.1} parent=1 // pred_check_branch
      %633 = sbr.rel (0) target = $region21
    $region20: #{lstm_forward.1} parent=1 // pred_region
      %635 = dma.done [#allocation4], 16
    $region21: #{lstm_forward.1} parent=1 // pred_fallthru
      _
    %636 = vsyncpa [#allocation3], 1
    %637 = vsyncpa [#allocation4], 1

</llo_original>
